<compile_context>
chip_gen: v7x
topology: tpu7x:2x2x1
jax: 0.10.0
libtpu: 0.0.40
codegen_flags: <defaults>
</compile_context>

<pallas_src>
import functools

import jax
import jax.numpy as jnp
from jax.experimental import pallas as pl
from jax.experimental.pallas import tpu as pltpu

F32 = jnp.float32
BF16 = jnp.bfloat16


def _round_up(x, m):
  return ((x + m - 1) // m) * m


def _vmem_limit_bytes():
  # Generation-dependent scoped-VMEM limit (leave ~16 MiB headroom):
  # 128 MiB parts (v5e/v6e) -> ~112 MiB, 64 MiB parts (v7x) -> ~48 MiB.
  cap = 64 * 1024 * 1024          # conservative fallback = v7x physical VMEM
  try:
    cap = int(pltpu.get_tpu_info().vmem_capacity_bytes)
  except Exception:
    pass
  return int(max(32 * 1024 * 1024, min(cap - 16 * 1024 * 1024, 112 * 1024 * 1024)))


# ----------------------------------------------------------------------------
# Kernel 1: fused node projections (grid over node blocks, "parallel").
# One [node_block, 2D] x [2D, 8D] matmul on packed [h|p] input.
#   edge pack (lanes, narrow dtype): [B1 | p | A2 | C2 | B2 | c3*p]
#   node pack (f32)               : [A1 | C1]
# ----------------------------------------------------------------------------
def node_proj_kernel(hp_ref, w_ref, bias_ref, pack_e_ref, pack_n_ref, *, d):
  full = jnp.dot(hp_ref[...], w_ref[...], preferred_element_type=F32) + bias_ref[...]
  pack_e_ref[...] = full[:, 0:6 * d].astype(pack_e_ref.dtype)
  pack_n_ref[...] = full[:, 6 * d:8 * d]


# ----------------------------------------------------------------------------
# Kernel 2: fused edge pass (grid (edge_splits, e_blocks/split),
# ("parallel","arbitrary")).  Builds one-hot masks in-register, gathers src/dst
# fields, computes hat_eta, and scatters [sigma | sigma*A2 | sigma*C2] into a
# per-core-resident node accumulator in ONE matmul.  Also accumulates the BN
# statistics for e.
# ----------------------------------------------------------------------------
def edge_fused_kernel(pack_ref, e_ref, src_ref, dst_ref, wb3_ref, bb3_ref,
                      hat_ref, nacc_ref, estat_ref,
                      *, d, edge_block, n_real_edges):
  c = pl.program_id(0)
  ke = pl.program_id(1)

  @pl.when(ke == 0)
  def _init():
    nacc_ref[...] = jnp.zeros_like(nacc_ref)
    estat_ref[...] = jnp.zeros_like(estat_ref)

  pack = pack_ref[...]                                   # [n_pad, 6D]
  mdt = pack.dtype                                       # bf16 (or f32 fallback)
  n_pad = pack.shape[0]
  iota_n = jax.lax.broadcasted_iota(jnp.int32, (edge_block, n_pad), 1)
  m_src = (iota_n == src_ref[...]).astype(mdt)           # one-hot, exact in bf16
  m_dst = (iota_n == dst_ref[...]).astype(mdt)

  # gathers (MXU): src -> [B1 | p | A2 | C2] (vreg-aligned 128-lane slice),
  #                dst -> [B2 | c3*p]
  g_src = jnp.dot(m_src, pack[:, 0:4 * d], preferred_element_type=F32)
  g_dst = jnp.dot(m_dst, pack[:, 4 * d:6 * d], preferred_element_type=F32)

  b3 = jnp.dot(e_ref[...], wb3_ref[...], preferred_element_type=F32) + bb3_ref[...]
  # lane-aligned product: (c3*p_dst) at lanes d:2d * p_src at lanes d:2d
  hat = (g_src[:, 0:d] + g_dst[:, 0:d] + b3 +
         g_dst[:, d:2 * d] * g_src[:, d:2 * d])
  hat_ref[...] = hat

  sigma = jax.nn.sigmoid(hat)
  # single fused scatter (segment-sum over dst nodes):
  #   payload = [sigma | sigma*A2_src | sigma*C2_src]   (3D lanes)
  msg = g_src[:, 2 * d:4 * d] * jnp.tile(sigma, (1, 2))
  payload = jnp.concatenate([sigma, msg], axis=1).astype(mdt)
  nacc_ref[...] += jax.lax.dot_general(
      m_dst, payload, dimension_numbers=(((0,), (0,)), ((), ())),
      preferred_element_type=F32)

  # BatchNorm statistics for e (exclude padded edge rows).
  blk = c * pl.num_programs(1) + ke
  rows = jax.lax.broadcasted_iota(jnp.int32, (edge_block, d), 0) + blk * edge_block
  hv = hat * (rows < n_real_edges).astype(F32)
  estat_ref[0:1, :] += jnp.sum(hv, axis=0, keepdims=True)
  estat_ref[1:2, :] += jnp.sum(hv * hat, axis=0, keepdims=True)


# ----------------------------------------------------------------------------
# Kernel 3: node pre-activation + late eta-normalization + h BN statistics
# (grid over node blocks, "arbitrary" because of the resident stats output).
# ----------------------------------------------------------------------------
def node_pre_kernel(pack_n_ref, nacc_ref, snorm_ref, pre_ref, hstat_ref,
                    *, d, node_block, n_real_nodes):
  ib = pl.program_id(0)

  @pl.when(ib == 0)
  def _init():
    hstat_ref[...] = jnp.zeros_like(hstat_ref)

  acc = jnp.sum(nacc_ref[...], axis=0)                   # combine core slabs
  den = acc[:, 0:d] + 1e-6
  inv = pl.reciprocal(den, approx=True)                  # EUP slot
  inv = inv * (2.0 - den * inv)                          # one Newton step
  h_pre = (pack_n_ref[:, 0:d] + acc[:, d:2 * d] * inv) * snorm_ref[...]
  p_pre = pack_n_ref[:, d:2 * d] + acc[:, 2 * d:3 * d] * inv
  pre_ref[:, 0:d] = h_pre
  pre_ref[:, d:2 * d] = p_pre

  rows = jax.lax.broadcasted_iota(jnp.int32, (node_block, d), 0) + ib * node_block
  hv = h_pre * (rows < n_real_nodes).astype(F32)
  hstat_ref[0:1, :] += jnp.sum(hv, axis=0, keepdims=True)
  hstat_ref[1:2, :] += jnp.sum(hv * h_pre, axis=0, keepdims=True)


# ----------------------------------------------------------------------------
# Kernel 4: node finalize (BN + relu / tanh + residual), lane-dense [nb, 2D]
# packed output, grid "parallel".
# ----------------------------------------------------------------------------
def node_out_kernel(pre_ref, hp_ref, hstat_ref, gamma_ref, beta_ref, hp_out_ref,
                    *, d, n_real_nodes, batch_norm, residual):
  h_new = pre_ref[:, 0:d]
  p_new = pre_ref[:, d:2 * d]
  if batch_norm:
    s = hstat_ref[...]
    mean = s[0:1, :] * (1.0 / n_real_nodes)
    # clamp: E[x^2]-E[x]^2 can cancel slightly negative in f32
    var = jnp.maximum(s[1:2, :] * (1.0 / n_real_nodes) - mean * mean, 0.0)
    h_new = gamma_ref[...] * (h_new - mean) * jax.lax.rsqrt(var + 1e-5) + beta_ref[...]
  h_new = jnp.maximum(h_new, 0.0)
  p_new = jnp.tanh(p_new)
  if residual:
    h_new = h_new + hp_ref[:, 0:d]
    p_new = p_new + hp_ref[:, d:2 * d]
  hp_out_ref[:, 0:d] = h_new
  hp_out_ref[:, d:2 * d] = p_new


# ----------------------------------------------------------------------------
# Kernel 5: edge finalize (BN + relu + residual), grid "parallel".
# ----------------------------------------------------------------------------
def edge_out_kernel(hat_ref, e_ref, estat_ref, gamma_ref, beta_ref, e_out_ref,
                    *, n_real_edges, batch_norm, residual):
  x = hat_ref[...]
  if batch_norm:
    s = jnp.sum(estat_ref[...], axis=0)                  # combine core slabs
    mean = s[0:1, :] * (1.0 / n_real_edges)
    var = jnp.maximum(s[1:2, :] * (1.0 / n_real_edges) - mean * mean, 0.0)
    x = gamma_ref[...] * (x - mean) * jax.lax.rsqrt(var + 1e-5) + beta_ref[...]
  x = jnp.maximum(x, 0.0)
  if residual:
    x = x + e_ref[...]
  e_out_ref[...] = x


# ----------------------------------------------------------------------------
# Wrapper: pads to block multiples, fuses weights, launches the pipeline.
# ----------------------------------------------------------------------------
def gatedgcn_lspe_forward(h, p, e, snorm_n, src, dst, params,
                          *, batch_norm=True, residual=True,
                          node_block=256, edge_block=128, edge_splits=2,
                          mxu_bf16=True):
  N, D = h.shape
  E = e.shape[0]
  assert edge_block % 8 == 0
  assert node_block % (16 if mxu_bf16 else 8) == 0

  n_pad = _round_up(N, node_block)
  e_pad = _round_up(E, edge_splits * edge_block)
  n_blocks = n_pad // node_block
  e_blocks = e_pad // edge_block
  ebh = e_blocks // edge_splits                  # edge blocks per core split
  pad_n, pad_e = n_pad - N, e_pad - E

  hp = jnp.pad(jnp.concatenate([h.astype(F32), p.astype(F32)], axis=1),
               ((0, pad_n), (0, 0)))
  sn = jnp.pad(snorm_n.astype(F32), ((0, pad_n), (0, 0)))
  e_p = jnp.pad(e.astype(F32), ((0, pad_e), (0, 0)))
  # Padded edges point at node index n_pad: never matches any node row, so they
  # contribute nothing to gathers/scatters; stats mask them explicitly.
  src_p = jnp.concatenate([src.astype(jnp.int32),
                           jnp.full((pad_e,), n_pad, jnp.int32)]).reshape(e_pad, 1)
  dst_p = jnp.concatenate([dst.astype(jnp.int32),
                           jnp.full((pad_e,), n_pad, jnp.int32)]).reshape(e_pad, 1)

  # ---- fused projection weights: [h|p] @ W + bias,  W: [2D, 8D] --------------
  # pack columns: [B1 | p | A2 | C2 | B2 | c3*p | A1 | C1]
  z = jnp.zeros((D, D), F32)
  eye = jnp.eye(D, dtype=F32)
  c3 = params['c3'][0, 0]
  w_h = jnp.concatenate([params['wB1'], z, params['wA2h'], z,
                         params['wB2'], z, params['wA1h'], z], axis=1)
  w_p = jnp.concatenate([z, eye, params['wA2p'], params['wC2'],
                         z, c3 * eye, params['wA1p'], params['wC1']], axis=1)
  w = jnp.concatenate([w_h, w_p], axis=0)
  zb = jnp.zeros((1, D), F32)
  bias = jnp.concatenate([params['bB1'], zb, params['bA2'], params['bC2'],
                          params['bB2'], zb, params['bA1'], params['bC1']], axis=1)

  pack_dtype = BF16 if mxu_bf16 else F32
  vmem = _vmem_limit_bytes()

  def cparams(sem):
    return pltpu.CompilerParams(dimension_semantics=sem, vmem_limit_bytes=vmem)

  # ---- 1. fused node projections --------------------------------------------
  pack_e, pack_n = pl.pallas_call(
      functools.partial(node_proj_kernel, d=D),
      grid=(n_blocks,),
      in_specs=[pl.BlockSpec((node_block, 2 * D), lambda i: (i, 0)),
                pl.BlockSpec((2 * D, 8 * D), lambda i: (0, 0)),
                pl.BlockSpec((1, 8 * D), lambda i: (0, 0))],
      out_specs=(pl.BlockSpec((node_block, 6 * D), lambda i: (i, 0)),
                 pl.BlockSpec((node_block, 2 * D), lambda i: (i, 0))),
      out_shape=(jax.ShapeDtypeStruct((n_pad, 6 * D), pack_dtype),
                 jax.ShapeDtypeStruct((n_pad, 2 * D), F32)),
      compiler_params=cparams(("parallel",)),
  )(hp, w, bias)

  # ---- 2. fused edge pass (gate + scatter + e BN stats) ----------------------
  gate_cost = pl.CostEstimate(
      flops=int(2 * e_pad * n_pad * 9 * D + 2 * e_pad * D * D),
      transcendentals=int(e_pad * D),
      bytes_accessed=int(n_pad * 6 * D * (2 if mxu_bf16 else 4)
                         + 4 * (e_pad * (2 * D + 2)
                                + edge_splits * (n_pad * 3 * D + 2 * D)
                                + D * D + D)))
  hat_eta, nacc, e_stats = pl.pallas_call(
      functools.partial(edge_fused_kernel, d=D, edge_block=edge_block,
                        n_real_edges=E),
      grid=(edge_splits, ebh),
      in_specs=[pl.BlockSpec((n_pad, 6 * D), lambda c, k: (0, 0)),
                pl.BlockSpec((edge_block, D), lambda c, k: (c * ebh + k, 0)),
                pl.BlockSpec((edge_block, 1), lambda c, k: (c * ebh + k, 0)),
                pl.BlockSpec((edge_block, 1), lambda c, k: (c * ebh + k, 0)),
                pl.BlockSpec((D, D), lambda c, k: (0, 0)),
                pl.BlockSpec((1, D), lambda c, k: (0, 0))],
      out_specs=(pl.BlockSpec((edge_block, D), lambda c, k: (c * ebh + k, 0)),
                 pl.BlockSpec((None, n_pad, 3 * D), lambda c, k: (c, 0, 0)),
                 pl.BlockSpec((None, 2, D), lambda c, k: (c, 0, 0))),
      out_shape=(jax.ShapeDtypeStruct((e_pad, D), F32),
                 jax.ShapeDtypeStruct((edge_splits, n_pad, 3 * D), F32),
                 jax.ShapeDtypeStruct((edge_splits, 2, D), F32)),
      compiler_params=cparams(("parallel", "arbitrary")),
      cost_estimate=gate_cost,
  )(pack_e, e_p, src_p, dst_p, params['wB3'], params['bB3'])

  # ---- 3. node pre-activation (late normalization) + h BN stats --------------
  pre, h_stats = pl.pallas_call(
      functools.partial(node_pre_kernel, d=D, node_block=node_block,
                        n_real_nodes=N),
      grid=(n_blocks,),
      in_specs=[pl.BlockSpec((node_block, 2 * D), lambda i: (i, 0)),
                pl.BlockSpec((edge_splits, node_block, 3 * D), lambda i: (0, i, 0)),
                pl.BlockSpec((node_block, 1), lambda i: (i, 0))],
      out_specs=(pl.BlockSpec((node_block, 2 * D), lambda i: (i, 0)),
                 pl.BlockSpec((2, D), lambda i: (0, 0))),
      out_shape=(jax.ShapeDtypeStruct((n_pad, 2 * D), F32),
                 jax.ShapeDtypeStruct((2, D), F32)),
      compiler_params=cparams(("arbitrary",)),
  )(pack_n, nacc, sn)

  # ---- 4. node finalize (packed lane-dense [N, 2D] output) -------------------
  hp_out = pl.pallas_call(
      functools.partial(node_out_kernel, d=D, n_real_nodes=N,
                        batch_norm=batch_norm, residual=residual),
      grid=(n_blocks,),
      in_specs=[pl.BlockSpec((node_block, 2 * D), lambda i: (i, 0)),
                pl.BlockSpec((node_block, 2 * D), lambda i: (i, 0)),
                pl.BlockSpec((2, D), lambda i: (0, 0)),
                pl.BlockSpec((1, D), lambda i: (0, 0)),
                pl.BlockSpec((1, D), lambda i: (0, 0))],
      out_specs=pl.BlockSpec((node_block, 2 * D), lambda i: (i, 0)),
      out_shape=jax.ShapeDtypeStruct((n_pad, 2 * D), F32),
      compiler_params=cparams(("parallel",)),
  )(pre, hp, h_stats, params['gamma_h'], params['beta_h'])

  # ---- 5. edge finalize -------------------------------------------------------
  e_out = pl.pallas_call(
      functools.partial(edge_out_kernel, n_real_edges=E,
                        batch_norm=batch_norm, residual=residual),
      grid=(e_blocks,),
      in_specs=[pl.BlockSpec((edge_block, D), lambda i: (i, 0)),
                pl.BlockSpec((edge_block, D), lambda i: (i, 0)),
                pl.BlockSpec((edge_splits, 2, D), lambda i: (0, 0, 0)),
                pl.BlockSpec((1, D), lambda i: (0, 0)),
                pl.BlockSpec((1, D), lambda i: (0, 0))],
      out_specs=pl.BlockSpec((edge_block, D), lambda i: (i, 0)),
      out_shape=jax.ShapeDtypeStruct((e_pad, D), F32),
      compiler_params=cparams(("parallel",)),
  )(hat_eta, e_p, e_stats, params['gamma_e'], params['beta_e'])

  return hp_out[:N, :D], hp_out[:N, D:], e_out[:E]


# ----------------------------------------------------------------------------
# Pure-JAX reference (gather + segment_sum) for correctness checking.
# ----------------------------------------------------------------------------
def reference_forward(h, p, e, snorm_n, src, dst, params,
                      *, batch_norm=True, residual=True):
  N = h.shape[0]
  seg = lambda m: jax.ops.segment_sum(m, dst, num_segments=N)
  A1_h = h @ params['wA1h'] + p @ params['wA1p'] + params['bA1']
  A2_hp = h @ params['wA2h'] + p @ params['wA2p'] + params['bA2']
  B1_h = h @ params['wB1'] + params['bB1']
  B2_h = h @ params['wB2'] + params['bB2']
  C1_p = p @ params['wC1'] + params['bC1']
  C2_p = p @ params['wC2'] + params['bC2']
  B3_e = e @ params['wB3'] + params['bB3']
  c3 = params['c3'][0, 0]
  hat_eta = B1_h[src] + B2_h[dst] + B3_e + p[dst] * c3 * p[src]
  sigma = jax.nn.sigmoid(hat_eta)
  eta = sigma / (seg(sigma)[dst] + 1e-6)
  h_new = A1_h + seg(eta * A2_hp[src])
  p_new = C1_p + seg(eta * C2_p[src])
  e_new = hat_eta
  h_new = h_new * snorm_n
  if batch_norm:
    def bn(x, g, b):
      m = jnp.mean(x, axis=0, keepdims=True)
      v = jnp.mean((x - m) ** 2, axis=0, keepdims=True)
      return g * (x - m) * jax.lax.rsqrt(v + 1e-5) + b
    h_new = bn(h_new, params['gamma_h'], params['beta_h'])
    e_new = bn(e_new, params['gamma_e'], params['beta_e'])
  h_new = jax.nn.relu(h_new)
  e_new = jax.nn.relu(e_new)
  p_new = jnp.tanh(p_new)
  if residual:
    h_new, p_new, e_new = h + h_new, p + p_new, e + e_new
  return h_new, p_new, e_new


# ----------------------------------------------------------------------------
# Deterministic parameter init (PyTorch nn.Linear default U(-1/sqrt(fan_in),.)).
# ----------------------------------------------------------------------------
def init_params(key, dim):
  ks = list(jax.random.split(key, 20))

  def lin(kw, kb, fan_in, shape_w):
    bound = 1.0 / jnp.sqrt(fan_in)
    w = jax.random.uniform(kw, shape_w, F32, -bound, bound)
    b = jax.random.uniform(kb, (1, dim), F32, -bound, bound)
    return w, b

  prm = {}
  wA1h, bA1 = lin(ks[0], ks[1], 2 * dim, (dim, dim))
  wA1p, _ = lin(ks[2], ks[3], 2 * dim, (dim, dim))
  prm.update(wA1h=wA1h, wA1p=wA1p, bA1=bA1)
  wA2h, bA2 = lin(ks[4], ks[5], 2 * dim, (dim, dim))
  wA2p, _ = lin(ks[6], ks[7], 2 * dim, (dim, dim))
  prm.update(wA2h=wA2h, wA2p=wA2p, bA2=bA2)
  for name, kw, kb in (('B1', ks[8], ks[9]), ('B2', ks[10], ks[11]),
                       ('B3', ks[12], ks[13]), ('C1', ks[14], ks[15]),
                       ('C2', ks[16], ks[17])):
    w, b = lin(kw, kb, dim, (dim, dim))
    prm['w' + name], prm['b' + name] = w, b
  # TODO(synk): self.C3 / self.C4 are used in forward() but never defined in the
  # PyTorch __init__; C3 is modeled as a scalar parameter (init 0.5), C4
  # (g.ndata['C4_p']) is dead code in the forward pass and is omitted.
  prm['c3'] = jnp.full((1, 1), 0.5, F32)
  prm['gamma_h'] = jnp.ones((1, dim), F32)
  prm['beta_h'] = jnp.zeros((1, dim), F32)
  prm['gamma_e'] = jnp.ones((1, dim), F32)
  prm['beta_e'] = jnp.zeros((1, dim), F32)
  return prm


if __name__ == "__main__":
  N, DIM = 16, 32
  key = jax.random.PRNGKey(0)
  k_h, k_p, k_e, k_params = jax.random.split(key, 4)

  # deterministic small graph: union of skip-1..skip-10 rings -> E = 160
  nodes = jnp.arange(N, dtype=jnp.int32)
  src = jnp.concatenate([(nodes + k) % N for k in range(1, 11)])
  dst = jnp.concatenate([nodes for _ in range(1, 11)])
  E = int(src.shape[0])

  h = jax.random.normal(k_h, (N, DIM), F32)
  p = jax.random.normal(k_p, (N, DIM), F32)
  e = jax.random.normal(k_e, (E, DIM), F32)
  snorm_n = jnp.full((N, 1), 1.0 / jnp.sqrt(float(N)), F32)
  params = init_params(k_params, DIM)

  h_ref, p_ref, e_ref = reference_forward(
      h, p, e, snorm_n, src, dst, params, batch_norm=True, residual=True)

  # Default (performance) configuration: bf16 MXU operands, big tiles, 2-way
  # edge split across TensorCores; bf16 gathers/scatters keep errors at the
  # few-1e-3 level -> loose tolerance here, exact-f32 run below is tight.
  h1, p1, e1 = gatedgcn_lspe_forward(h, p, e, snorm_n, src, dst, params,
                                     batch_norm=True, residual=True)
  jax.block_until_ready((h1, p1, e1))
  assert jnp.allclose(h1, h_ref, rtol=2e-2, atol=2e-2)
  assert jnp.allclose(p1, p_ref, rtol=2e-2, atol=2e-2)
  assert jnp.allclose(e1, e_ref, rtol=2e-2, atol=2e-2)

  # Exact-f32 path with tiny blocks: exercises multi-block node/edge grids,
  # padding, and the resident-accumulator init/accumulate logic.
  h2, p2, e2 = gatedgcn_lspe_forward(h, p, e, snorm_n, src, dst, params,
                                     batch_norm=True, residual=True,
                                     node_block=8, edge_block=32,
                                     mxu_bf16=False)
  jax.block_until_ready((h2, p2, e2))
  assert jnp.allclose(h2, h_ref, rtol=2e-3, atol=2e-3)
  assert jnp.allclose(p2, p_ref, rtol=2e-3, atol=2e-3)
  assert jnp.allclose(e2, e_ref, rtol=2e-3, atol=2e-3)

  # TODO(synk): F.dropout is identity at inference (training=False); omitted.
  print("KERNEL_OK")
</pallas_src>

<mosaic_0001>
module attributes {stable_mosaic.version = 11 : i64} {
  func.func @node_proj_kernel(%arg0: i32, %arg1: memref<256x64xf32, #tpu.memory_space<vmem>>, %arg2: memref<64x256xf32, #tpu.memory_space<vmem>>, %arg3: memref<1x256xf32, #tpu.memory_space<vmem>>, %arg4: memref<256x192xbf16, #tpu.memory_space<vmem>>, %arg5: memref<256x64xf32, #tpu.memory_space<vmem>>) attributes {dimension_semantics = [#tpu.dimension_semantics<parallel>], iteration_bounds = array<i64: 1>, scalar_prefetch = 0 : i64, scratch_operands = 0 : i64, tpu.core_type = #tpu.core_type<tc>, window_params = [{transform_indices = @transform_0, window_bounds = array<i64: 256, 64>}, {pipeline_mode = #tpu.pipeline_mode<synchronous>, transform_indices = @transform_1, window_bounds = array<i64: 64, 256>}, {pipeline_mode = #tpu.pipeline_mode<synchronous>, transform_indices = @transform_2, window_bounds = array<i64: 1, 256>}, {transform_indices = @transform_3, window_bounds = array<i64: 256, 192>}, {transform_indices = @transform_4, window_bounds = array<i64: 256, 64>}]} {
    %c0 = arith.constant 0 : index
    %c0_0 = arith.constant 0 : index
    %0 = vector.load %arg1[%c0, %c0_0] : memref<256x64xf32, #tpu.memory_space<vmem>>, vector<256x64xf32>
    %c0_1 = arith.constant 0 : index
    %c0_2 = arith.constant 0 : index
    %1 = vector.load %arg2[%c0_1, %c0_2] : memref<64x256xf32, #tpu.memory_space<vmem>>, vector<64x256xf32>
    %cst = arith.constant dense<0.000000e+00> : vector<256x256xf32>
    %2 = tpu.matmul %0, %1, %cst {dimension_numbers = #tpu.dot_dimension_numbers<[1], [0], [0], [1], [0, 0, 1, 1], [], []>} : vector<256x64xf32>, vector<64x256xf32>, vector<256x256xf32> -> vector<256x256xf32>
    %c0_3 = arith.constant 0 : index
    %c0_4 = arith.constant 0 : index
    %3 = vector.load %arg3[%c0_3, %c0_4] : memref<1x256xf32, #tpu.memory_space<vmem>>, vector<1x256xf32>
    %4 = vector.broadcast %3 : vector<1x256xf32> to vector<256x256xf32>
    %5 = arith.addf %2, %4 : vector<256x256xf32>
    %6 = vector.extract_strided_slice %5 {offsets = [0, 0], sizes = [256, 192], strides = [1, 1]} : vector<256x256xf32> to vector<256x192xf32>
    %7 = arith.truncf %6 : vector<256x192xf32> to vector<256x192xbf16>
    %c0_5 = arith.constant 0 : index
    %c0_6 = arith.constant 0 : index
    %8 = vector.load %arg4[%c0_5, %c0_6] : memref<256x192xbf16, #tpu.memory_space<vmem>>, vector<256x192xbf16>
    tpu.vector_store %arg4[%c0_5, %c0_6], %7 {strides = array<i32>} : memref<256x192xbf16, #tpu.memory_space<vmem>>, vector<256x192xbf16>,
    %9 = vector.extract_strided_slice %5 {offsets = [0, 192], sizes = [256, 64], strides = [1, 1]} : vector<256x256xf32> to vector<256x64xf32>
    %c0_7 = arith.constant 0 : index
    %c0_8 = arith.constant 0 : index
    %10 = vector.load %arg5[%c0_7, %c0_8] : memref<256x64xf32, #tpu.memory_space<vmem>>, vector<256x64xf32>
    tpu.vector_store %arg5[%c0_7, %c0_8], %9 {strides = array<i32>} : memref<256x64xf32, #tpu.memory_space<vmem>>, vector<256x64xf32>,
    return
  }
  func.func @transform_0(%arg0: i32) -> (i32, i32) {
    %c0_i32 = arith.constant 0 : i32
    %c0_i32_0 = arith.constant 0 : i32
    return %arg0, %c0_i32 : i32, i32
  }
  func.func @transform_1(%arg0: i32) -> (i32, i32) {
    %c0_i32 = arith.constant 0 : i32
    %c0_i32_0 = arith.constant 0 : i32
    %c0_i32_1 = arith.constant 0 : i32
    return %c0_i32, %c0_i32_0 : i32, i32
  }
  func.func @transform_2(%arg0: i32) -> (i32, i32) {
    %c0_i32 = arith.constant 0 : i32
    %c0_i32_0 = arith.constant 0 : i32
    %c0_i32_1 = arith.constant 0 : i32
    return %c0_i32, %c0_i32_0 : i32, i32
  }
  func.func @transform_3(%arg0: i32) -> (i32, i32) {
    %c0_i32 = arith.constant 0 : i32
    %c0_i32_0 = arith.constant 0 : i32
    return %arg0, %c0_i32 : i32, i32
  }
  func.func @transform_4(%arg0: i32) -> (i32, i32) {
    %c0_i32 = arith.constant 0 : i32
    %c0_i32_0 = arith.constant 0 : i32
    return %arg0, %c0_i32 : i32, i32
  }
}

</mosaic_0001>

<llo_original>
// kernel: tpu_custom_call.1
$region0: #{tpu_custom_call.1}
  #allocation0 [shape = 'u32[]', space=smem, size = 0x4, offset = 0x4, fixed_abs, tag = 'smem constant byte address 0x4 - core index']
  #allocation1 [shape = 'u32[144,128]{1,0:T(1,128)}', space=vmem, size = 0x12000, scoped, tag = 'internal scratch']
  %s0 = inlined_call_operand.vmem [shape: f32[256,64], index: 0, kind: input, shape index: {}]
  %s1 = inlined_call_operand.vmem [shape: f32[64,256], index: 1, kind: input, shape index: {}]
  %s2 = inlined_call_operand.vmem [shape: f32[1,256], index: 2, kind: input, shape index: {}]
  %s3 = inlined_call_operand.vmem [shape: bf16[256,192], index: 3, kind: output, shape index: {0}]
  %s4 = inlined_call_operand.vmem [shape: f32[256,64], index: 4, kind: output, shape index: {1}]
  %5 = xla_tuple %s3, %s4
  %s6 = sld [smem:[#allocation0]]
  $region30: #{tpu_custom_call.1} parent=0
    _
  %s8 = ssub.s32 1, %s6
  %s9 = scalar_select 0, %s8, %s6
  // Predicated region
  $region2: #{tpu_custom_call.1} parent=0 // pred_check
    _
  $region3: #{tpu_custom_call.1} parent=0 // pred_check_branch
    %11 = sbr.rel (0) target = $region5
  $region4: #{tpu_custom_call.1} parent=0 // pred_region
    _
  $region5: #{tpu_custom_call.1} parent=0 // pred_fallthru
    _
  // Predicated region
  $region6: #{tpu_custom_call.1} parent=0 // pred_check
    _
  $region7: #{tpu_custom_call.1} parent=0 // pred_check_branch
    %13 = sbr.rel (0) target = $region9
  $region8: #{tpu_custom_call.1} parent=0 // pred_region
    _
  $region9: #{tpu_custom_call.1} parent=0 // pred_fallthru
    _
  // Predicated region
  $region10: #{tpu_custom_call.1} parent=0 // pred_check
    _
  $region11: #{tpu_custom_call.1} parent=0 // pred_check_branch
    %15 = sbr.rel (0) target = $region13
  $region12: #{tpu_custom_call.1} parent=0 // pred_region
    _
  $region13: #{tpu_custom_call.1} parent=0 // pred_fallthru
    _
  %v16 = vld [vmem:[%s0] sm:$0xff]
  %v17 = vld [vmem:[%s0 + $0x8] sm:$0xff]
  %v18 = vld [vmem:[%s0 + $0x10] sm:$0xff]
  %v19 = vld [vmem:[%s0 + $0x18] sm:$0xff]
  %v20 = vld [vmem:[%s0 + $0x20] sm:$0xff]
  %v21 = vld [vmem:[%s0 + $0x28] sm:$0xff]
  %v22 = vld [vmem:[%s0 + $0x30] sm:$0xff]
  %v23 = vld [vmem:[%s0 + $0x38] sm:$0xff]
  %v24 = vld [vmem:[%s0 + $0x40] sm:$0xff]
  %v25 = vld [vmem:[%s0 + $0x48] sm:$0xff]
  %v26 = vld [vmem:[%s0 + $0x50] sm:$0xff]
  %v27 = vld [vmem:[%s0 + $0x58] sm:$0xff]
  %v28 = vld [vmem:[%s0 + $0x60] sm:$0xff]
  %v29 = vld [vmem:[%s0 + $0x68] sm:$0xff]
  %v30 = vld [vmem:[%s0 + $0x70] sm:$0xff]
  %v31 = vld [vmem:[%s0 + $0x78] sm:$0xff]
  %v32 = vld [vmem:[%s0 + $0x80] sm:$0xff]
  %v33 = vld [vmem:[%s0 + $0x88] sm:$0xff]
  %v34 = vld [vmem:[%s0 + $0x90] sm:$0xff]
  %v35 = vld [vmem:[%s0 + $0x98] sm:$0xff]
  %v36 = vld [vmem:[%s0 + $0xa0] sm:$0xff]
  %v37 = vld [vmem:[%s0 + $0xa8] sm:$0xff]
  %v38 = vld [vmem:[%s0 + $0xb0] sm:$0xff]
  %v39 = vld [vmem:[%s0 + $0xb8] sm:$0xff]
  %v40 = vld [vmem:[%s0 + $0xc0] sm:$0xff]
  %v41 = vld [vmem:[%s0 + $0xc8] sm:$0xff]
  %v42 = vld [vmem:[%s0 + $0xd0] sm:$0xff]
  %v43 = vld [vmem:[%s0 + $0xd8] sm:$0xff]
  %v44 = vld [vmem:[%s0 + $0xe0] sm:$0xff]
  %v45 = vld [vmem:[%s0 + $0xe8] sm:$0xff]
  %v46 = vld [vmem:[%s0 + $0xf0] sm:$0xff]
  %v47 = vld [vmem:[%s0 + $0xf8] sm:$0xff]
  %v48 = vld [vmem:[%s1] sm:$0xff]
  %v49 = vld [vmem:[%s1 + $0x8] sm:$0xff]
  %v50 = vld [vmem:[%s1 + $0x10] sm:$0xff]
  %v51 = vld [vmem:[%s1 + $0x18] sm:$0xff]
  %v52 = vld [vmem:[%s1 + $0x20] sm:$0xff]
  %v53 = vld [vmem:[%s1 + $0x28] sm:$0xff]
  %v54 = vld [vmem:[%s1 + $0x30] sm:$0xff]
  %v55 = vld [vmem:[%s1 + $0x38] sm:$0xff]
  %v56 = vld [vmem:[%s1 + $0x40] sm:$0xff]
  %v57 = vld [vmem:[%s1 + $0x48] sm:$0xff]
  %v58 = vld [vmem:[%s1 + $0x50] sm:$0xff]
  %v59 = vld [vmem:[%s1 + $0x58] sm:$0xff]
  %v60 = vld [vmem:[%s1 + $0x60] sm:$0xff]
  %v61 = vld [vmem:[%s1 + $0x68] sm:$0xff]
  %v62 = vld [vmem:[%s1 + $0x70] sm:$0xff]
  %v63 = vld [vmem:[%s1 + $0x78] sm:$0xff]
  %v64 = vld [vmem:[%s2] sm:$0x3]
  %v66 = vlaneseq
  %v67 = vshrl.u32 %v66, 7
  %v68 = vsub.s32 0, %v67
  %v69 = vrot.slane %v64, %v68
  %v70 = vlaneseq
  %v71 = vshrl.u32 %v70, 7
  %v72 = vsub.s32 1, %v71
  %v73 = vrot.slane %v64, %v72
  %vm76 = vcmask 523264
  %v78 = vsel %vm76, %v16, 0
  %v81 = vsel %vm76, %v17, 0
  %v84 = vsel %vm76, %v18, 0
  %v87 = vsel %vm76, %v19, 0
  %v90 = vsel %vm76, %v20, 0
  %v93 = vsel %vm76, %v21, 0
  %v96 = vsel %vm76, %v22, 0
  %v99 = vsel %vm76, %v23, 0
  %v102 = vsel %vm76, %v24, 0
  %v105 = vsel %vm76, %v25, 0
  %v108 = vsel %vm76, %v26, 0
  %v111 = vsel %vm76, %v27, 0
  %v114 = vsel %vm76, %v28, 0
  %v117 = vsel %vm76, %v29, 0
  %v120 = vsel %vm76, %v30, 0
  %v123 = vsel %vm76, %v31, 0
  %v126 = vsel %vm76, %v32, 0
  %v129 = vsel %vm76, %v33, 0
  %v132 = vsel %vm76, %v34, 0
  %v135 = vsel %vm76, %v35, 0
  %v138 = vsel %vm76, %v36, 0
  %v141 = vsel %vm76, %v37, 0
  %v144 = vsel %vm76, %v38, 0
  %v147 = vsel %vm76, %v39, 0
  %v150 = vsel %vm76, %v40, 0
  %v153 = vsel %vm76, %v41, 0
  %v156 = vsel %vm76, %v42, 0
  %v159 = vsel %vm76, %v43, 0
  %v162 = vsel %vm76, %v44, 0
  %v165 = vsel %vm76, %v45, 0
  %v168 = vsel %vm76, %v46, 0
  %v171 = vsel %vm76, %v47, 0
  %173 = vmatprep.subr.mxu0 %v49
  %174 = vmatpush1.msra.mxu0 %v48
  %175 = vmatprep.subr.mxu0 %v51
  %176 = vmatpush1.msra.mxu0 %v50
  %177 = vmatprep.subr.mxu0 %v53
  %178 = vmatpush1.msra.mxu0 %v52
  %179 = vmatprep.subr.mxu0 %v55
  %180 = vmatpush1.msra.mxu0 %v54
  %181 = vmatprep.subr.mxu0 %v57
  %182 = vmatpush1.msra.mxu0 %v56
  %183 = vmatprep.subr.mxu0 %v59
  %184 = vmatpush1.msra.mxu0 %v58
  %185 = vmatprep.subr.mxu0 %v61
  %186 = vmatpush1.msra.mxu0 %v60
  %187 = vmatprep.subr.mxu0 %v63
  %188 = vmatpush1.msra.mxu0 %v62
  %189 = vmatprep.subr.mxu0 0.0
  %190 = vmatpush1.msra.mxu0 0.0
  %191 = vmatprep.subr.mxu0 0.0
  %192 = vmatpush1.msra.mxu0 0.0
  %193 = vmatprep.subr.mxu0 0.0
  %194 = vmatpush1.msra.mxu0 0.0
  %195 = vmatprep.subr.mxu0 0.0
  %196 = vmatpush1.msra.mxu0 0.0
  %197 = vmatprep.subr.mxu0 0.0
  %198 = vmatpush1.msra.mxu0 0.0
  %199 = vmatprep.subr.mxu0 0.0
  %200 = vmatpush1.msra.mxu0 0.0
  %201 = vmatprep.subr.mxu0 0.0
  %202 = vmatpush1.msra.mxu0 0.0
  %203 = vmatprep.subr.mxu0 0.0
  %204 = vmatpush1.msra.mxu0 0.0
  %205 = vmatprep.subr.mxu0 0.0
  %206 = vmatpush1.msra.mxu0 0.0
  %207 = vmatprep.subr.mxu0 0.0
  %208 = vmatpush1.msra.mxu0 0.0
  %209 = vmatprep.subr.mxu0 0.0
  %210 = vmatpush1.msra.mxu0 0.0
  %211 = vmatprep.subr.mxu0 0.0
  %212 = vmatpush1.msra.mxu0 0.0
  %213 = vmatprep.subr.mxu0 0.0
  %214 = vmatpush1.msra.mxu0 0.0
  %215 = vmatprep.subr.mxu0 0.0
  %216 = vmatpush1.msra.mxu0 0.0
  %217 = vmatprep.subr.mxu0 0.0
  %218 = vmatpush1.msra.mxu0 0.0
  %219 = vmatprep.subr.mxu0 0.0
  %220 = vmatpush1.msra.mxu0 0.0
  %221 = vmatprep.subr.mxu0 0.0
  %222 = vmatpush1.msra.mxu0 0.0
  %223 = vmatprep.subr.mxu0 0.0
  %224 = vmatpush1.msra.mxu0 0.0
  %225 = vmatprep.subr.mxu0 0.0
  %226 = vmatpush1.msra.mxu0 0.0
  %227 = vmatprep.subr.mxu0 0.0
  %228 = vmatpush1.msra.mxu0 0.0
  %229 = vmatprep.subr.mxu0 0.0
  %230 = vmatpush1.msra.mxu0 0.0
  %231 = vmatprep.subr.mxu0 0.0
  %232 = vmatpush1.msra.mxu0 0.0
  %233 = vmatprep.subr.mxu0 0.0
  %234 = vmatpush1.msra.mxu0 0.0
  %235 = vmatprep.subr.mxu0 0.0
  %236 = vmatpush1.msra.mxu0 0.0
  %237 = vmatprep.mubr.f32.mxu0 0.0
  %238 = vmatmul.mubr.f32.gmra.mrb[0].mxu0 %v78
  %v239 = vpop.f32.mrb[0].mxu0
  %v240 = vadd.f32 %v69, %v239
  %v241 = vpop.f32.mrb[0].mxu0
  %v242 = vadd.f32 %v73, %v241
  %243 = vmatprep.mubr.f32.mxu0 0.0
  %244 = vmatmul.mubr.f32.gmra.mrb[0].mxu0 %v81
  %v245 = vpop.f32.mrb[0].mxu0
  %v246 = vadd.f32 %v69, %v245
  %v247 = vpop.f32.mrb[0].mxu0
  %v248 = vadd.f32 %v73, %v247
  %249 = vmatprep.mubr.f32.mxu0 0.0
  %250 = vmatmul.mubr.f32.gmra.mrb[0].mxu0 %v84
  %v251 = vpop.f32.mrb[0].mxu0
  %v252 = vadd.f32 %v69, %v251
  %v253 = vpop.f32.mrb[0].mxu0
  %v254 = vadd.f32 %v73, %v253
  %255 = vmatprep.mubr.f32.mxu0 0.0
  %256 = vmatmul.mubr.f32.gmra.mrb[0].mxu0 %v87
  %v257 = vpop.f32.mrb[0].mxu0
  %v258 = vadd.f32 %v69, %v257
  %v259 = vpop.f32.mrb[0].mxu0
  %v260 = vadd.f32 %v73, %v259
  %261 = vmatprep.mubr.f32.mxu0 0.0
  %262 = vmatmul.mubr.f32.gmra.mrb[0].mxu0 %v90
  %v263 = vpop.f32.mrb[0].mxu0
  %v264 = vadd.f32 %v69, %v263
  %v265 = vpop.f32.mrb[0].mxu0
  %v266 = vadd.f32 %v73, %v265
  %267 = vmatprep.mubr.f32.mxu0 0.0
  %268 = vmatmul.mubr.f32.gmra.mrb[0].mxu0 %v93
  %v269 = vpop.f32.mrb[0].mxu0
  %v270 = vadd.f32 %v69, %v269
  %v271 = vpop.f32.mrb[0].mxu0
  %v272 = vadd.f32 %v73, %v271
  %273 = vmatprep.mubr.f32.mxu0 0.0
  %274 = vmatmul.mubr.f32.gmra.mrb[0].mxu0 %v96
  %v275 = vpop.f32.mrb[0].mxu0
  %v276 = vadd.f32 %v69, %v275
  %v277 = vpop.f32.mrb[0].mxu0
  %v278 = vadd.f32 %v73, %v277
  %279 = vmatprep.mubr.f32.mxu0 0.0
  %280 = vmatmul.mubr.f32.gmra.mrb[0].mxu0 %v99
  %v281 = vpop.f32.mrb[0].mxu0
  %v282 = vadd.f32 %v69, %v281
  %v283 = vpop.f32.mrb[0].mxu0
  %v284 = vadd.f32 %v73, %v283
  %285 = vmatprep.mubr.f32.mxu0 0.0
  %286 = vmatmul.mubr.f32.gmra.mrb[0].mxu0 %v102
  %v287 = vpop.f32.mrb[0].mxu0
  %v288 = vadd.f32 %v69, %v287
  %v289 = vpop.f32.mrb[0].mxu0
  %v290 = vadd.f32 %v73, %v289
  %291 = vmatprep.mubr.f32.mxu0 0.0
  %292 = vmatmul.mubr.f32.gmra.mrb[0].mxu0 %v105
  %v293 = vpop.f32.mrb[0].mxu0
  %v294 = vadd.f32 %v69, %v293
  %v295 = vpop.f32.mrb[0].mxu0
  %v296 = vadd.f32 %v73, %v295
  %297 = vmatprep.mubr.f32.mxu0 0.0
  %298 = vmatmul.mubr.f32.gmra.mrb[0].mxu0 %v108
  %v299 = vpop.f32.mrb[0].mxu0
  %v300 = vadd.f32 %v69, %v299
  %v301 = vpop.f32.mrb[0].mxu0
  %v302 = vadd.f32 %v73, %v301
  %303 = vmatprep.mubr.f32.mxu0 0.0
  %304 = vmatmul.mubr.f32.gmra.mrb[0].mxu0 %v111
  %v305 = vpop.f32.mrb[0].mxu0
  %v306 = vadd.f32 %v69, %v305
  %v307 = vpop.f32.mrb[0].mxu0
  %v308 = vadd.f32 %v73, %v307
  %309 = vmatprep.mubr.f32.mxu0 0.0
  %310 = vmatmul.mubr.f32.gmra.mrb[0].mxu0 %v114
  %v311 = vpop.f32.mrb[0].mxu0
  %v312 = vadd.f32 %v69, %v311
  %v313 = vpop.f32.mrb[0].mxu0
  %v314 = vadd.f32 %v73, %v313
  %315 = vmatprep.mubr.f32.mxu0 0.0
  %316 = vmatmul.mubr.f32.gmra.mrb[0].mxu0 %v117
  %v317 = vpop.f32.mrb[0].mxu0
  %v318 = vadd.f32 %v69, %v317
  %v319 = vpop.f32.mrb[0].mxu0
  %v320 = vadd.f32 %v73, %v319
  %321 = vmatprep.mubr.f32.mxu0 0.0
  %322 = vmatmul.mubr.f32.gmra.mrb[0].mxu0 %v120
  %v323 = vpop.f32.mrb[0].mxu0
  %v324 = vadd.f32 %v69, %v323
  %v325 = vpop.f32.mrb[0].mxu0
  %v326 = vadd.f32 %v73, %v325
  %327 = vmatprep.mubr.f32.mxu0 0.0
  %328 = vmatmul.mubr.f32.gmra.mrb[0].mxu0 %v123
  %v329 = vpop.f32.mrb[0].mxu0
  %v330 = vadd.f32 %v69, %v329
  %v331 = vpop.f32.mrb[0].mxu0
  %v332 = vadd.f32 %v73, %v331
  %333 = vmatprep.mubr.f32.mxu0 0.0
  %334 = vmatmul.mubr.f32.gmra.mrb[0].mxu0 %v126
  %v335 = vpop.f32.mrb[0].mxu0
  %v336 = vadd.f32 %v69, %v335
  %v337 = vpop.f32.mrb[0].mxu0
  %v338 = vadd.f32 %v73, %v337
  %339 = vmatprep.mubr.f32.mxu0 0.0
  %340 = vmatmul.mubr.f32.gmra.mrb[0].mxu0 %v129
  %v341 = vpop.f32.mrb[0].mxu0
  %v342 = vadd.f32 %v69, %v341
  %v343 = vpop.f32.mrb[0].mxu0
  %v344 = vadd.f32 %v73, %v343
  %345 = vmatprep.mubr.f32.mxu0 0.0
  %346 = vmatmul.mubr.f32.gmra.mrb[0].mxu0 %v132
  %v347 = vpop.f32.mrb[0].mxu0
  %v348 = vadd.f32 %v69, %v347
  %v349 = vpop.f32.mrb[0].mxu0
  %v350 = vadd.f32 %v73, %v349
  %351 = vmatprep.mubr.f32.mxu0 0.0
  %352 = vmatmul.mubr.f32.gmra.mrb[0].mxu0 %v135
  %v353 = vpop.f32.mrb[0].mxu0
  %v354 = vadd.f32 %v69, %v353
  %v355 = vpop.f32.mrb[0].mxu0
  %v356 = vadd.f32 %v73, %v355
  %357 = vmatprep.mubr.f32.mxu0 0.0
  %358 = vmatmul.mubr.f32.gmra.mrb[0].mxu0 %v138
  %v359 = vpop.f32.mrb[0].mxu0
  %v360 = vadd.f32 %v69, %v359
  %v361 = vpop.f32.mrb[0].mxu0
  %v362 = vadd.f32 %v73, %v361
  %363 = vmatprep.mubr.f32.mxu0 0.0
  %364 = vmatmul.mubr.f32.gmra.mrb[0].mxu0 %v141
  %v365 = vpop.f32.mrb[0].mxu0
  %v366 = vadd.f32 %v69, %v365
  %v367 = vpop.f32.mrb[0].mxu0
  %v368 = vadd.f32 %v73, %v367
  %369 = vmatprep.mubr.f32.mxu0 0.0
  %370 = vmatmul.mubr.f32.gmra.mrb[0].mxu0 %v144
  %v371 = vpop.f32.mrb[0].mxu0
  %v372 = vadd.f32 %v69, %v371
  %v373 = vpop.f32.mrb[0].mxu0
  %v374 = vadd.f32 %v73, %v373
  %375 = vmatprep.mubr.f32.mxu0 0.0
  %376 = vmatmul.mubr.f32.gmra.mrb[0].mxu0 %v147
  %v377 = vpop.f32.mrb[0].mxu0
  %v378 = vadd.f32 %v69, %v377
  %v379 = vpop.f32.mrb[0].mxu0
  %v380 = vadd.f32 %v73, %v379
  %381 = vmatprep.mubr.f32.mxu0 0.0
  %382 = vmatmul.mubr.f32.gmra.mrb[0].mxu0 %v150
  %v383 = vpop.f32.mrb[0].mxu0
  %v384 = vadd.f32 %v69, %v383
  %v385 = vpop.f32.mrb[0].mxu0
  %v386 = vadd.f32 %v73, %v385
  %387 = vmatprep.mubr.f32.mxu0 0.0
  %388 = vmatmul.mubr.f32.gmra.mrb[0].mxu0 %v153
  %v389 = vpop.f32.mrb[0].mxu0
  %v390 = vadd.f32 %v69, %v389
  %v391 = vpop.f32.mrb[0].mxu0
  %v392 = vadd.f32 %v73, %v391
  %393 = vmatprep.mubr.f32.mxu0 0.0
  %394 = vmatmul.mubr.f32.gmra.mrb[0].mxu0 %v156
  %v395 = vpop.f32.mrb[0].mxu0
  %v396 = vadd.f32 %v69, %v395
  %v397 = vpop.f32.mrb[0].mxu0
  %v398 = vadd.f32 %v73, %v397
  %399 = vmatprep.mubr.f32.mxu0 0.0
  %400 = vmatmul.mubr.f32.gmra.mrb[0].mxu0 %v159
  %v401 = vpop.f32.mrb[0].mxu0
  %v402 = vadd.f32 %v69, %v401
  %v403 = vpop.f32.mrb[0].mxu0
  %v404 = vadd.f32 %v73, %v403
  %405 = vmatprep.mubr.f32.mxu0 0.0
  %406 = vmatmul.mubr.f32.gmra.mrb[0].mxu0 %v162
  %v407 = vpop.f32.mrb[0].mxu0
  %v408 = vadd.f32 %v69, %v407
  %v409 = vpop.f32.mrb[0].mxu0
  %v410 = vadd.f32 %v73, %v409
  %411 = vmatprep.mubr.f32.mxu0 0.0
  %412 = vmatmul.mubr.f32.gmra.mrb[0].mxu0 %v165
  %v413 = vpop.f32.mrb[0].mxu0
  %v414 = vadd.f32 %v69, %v413
  %v415 = vpop.f32.mrb[0].mxu0
  %v416 = vadd.f32 %v73, %v415
  %417 = vmatprep.mubr.f32.mxu0 0.0
  %418 = vmatmul.mubr.f32.gmra.mrb[0].mxu0 %v168
  %v419 = vpop.f32.mrb[0].mxu0
  %v420 = vadd.f32 %v69, %v419
  %v421 = vpop.f32.mrb[0].mxu0
  %v422 = vadd.f32 %v73, %v421
  %423 = vmatprep.mubr.f32.mxu0 0.0
  %424 = vmatmul.mubr.f32.gmra.mrb[0].mxu0 %v171
  %v425 = vpop.f32.mrb[0].mxu0
  %v426 = vadd.f32 %v69, %v425
  %v427 = vpop.f32.mrb[0].mxu0
  %v428 = vadd.f32 %v73, %v427
  %429 = vdwg.mxu0
  %v430 = vpack.c.bf16 %v246, %v240
  %v431 = vpack.c.bf16 %v248, %v242
  %v432 = vpack.c.bf16 %v258, %v252
  %v433 = vpack.c.bf16 %v260, %v254
  %v434 = vpack.c.bf16 %v270, %v264
  %v435 = vpack.c.bf16 %v272, %v266
  %v436 = vpack.c.bf16 %v282, %v276
  %v437 = vpack.c.bf16 %v284, %v278
  %v438 = vpack.c.bf16 %v294, %v288
  %v439 = vpack.c.bf16 %v296, %v290
  %v440 = vpack.c.bf16 %v306, %v300
  %v441 = vpack.c.bf16 %v308, %v302
  %v442 = vpack.c.bf16 %v318, %v312
  %v443 = vpack.c.bf16 %v320, %v314
  %v444 = vpack.c.bf16 %v330, %v324
  %v445 = vpack.c.bf16 %v332, %v326
  %v446 = vpack.c.bf16 %v342, %v336
  %v447 = vpack.c.bf16 %v344, %v338
  %v448 = vpack.c.bf16 %v354, %v348
  %v449 = vpack.c.bf16 %v356, %v350
  %v450 = vpack.c.bf16 %v366, %v360
  %v451 = vpack.c.bf16 %v368, %v362
  %v452 = vpack.c.bf16 %v378, %v372
  %v453 = vpack.c.bf16 %v380, %v374
  %v454 = vpack.c.bf16 %v390, %v384
  %v455 = vpack.c.bf16 %v392, %v386
  %v456 = vpack.c.bf16 %v402, %v396
  %v457 = vpack.c.bf16 %v404, %v398
  %v458 = vpack.c.bf16 %v414, %v408
  %v459 = vpack.c.bf16 %v416, %v410
  %v460 = vpack.c.bf16 %v426, %v420
  %v461 = vpack.c.bf16 %v428, %v422
  %v494 = vunpack.c.l.b16 %v430
  %v495 = vunpack.c.l.b16 %v431
  %v496 = vunpack.c.h.b16 %v430
  %v497 = vunpack.c.h.b16 %v431
  %v498 = vunpack.c.l.b16 %v432
  %v499 = vunpack.c.l.b16 %v433
  %v500 = vunpack.c.h.b16 %v432
  %v501 = vunpack.c.h.b16 %v433
  %v502 = vunpack.c.l.b16 %v434
  %v503 = vunpack.c.l.b16 %v435
  %v504 = vunpack.c.h.b16 %v434
  %v505 = vunpack.c.h.b16 %v435
  %v506 = vunpack.c.l.b16 %v436
  %v507 = vunpack.c.l.b16 %v437
  %v508 = vunpack.c.h.b16 %v436
  %v509 = vunpack.c.h.b16 %v437
  %v510 = vunpack.c.l.b16 %v438
  %v511 = vunpack.c.l.b16 %v439
  %v512 = vunpack.c.h.b16 %v438
  %v513 = vunpack.c.h.b16 %v439
  %v514 = vunpack.c.l.b16 %v440
  %v515 = vunpack.c.l.b16 %v441
  %v516 = vunpack.c.h.b16 %v440
  %v517 = vunpack.c.h.b16 %v441
  %v518 = vunpack.c.l.b16 %v442
  %v519 = vunpack.c.l.b16 %v443
  %v520 = vunpack.c.h.b16 %v442
  %v521 = vunpack.c.h.b16 %v443
  %v522 = vunpack.c.l.b16 %v444
  %v523 = vunpack.c.l.b16 %v445
  %v524 = vunpack.c.h.b16 %v444
  %v525 = vunpack.c.h.b16 %v445
  %v526 = vunpack.c.l.b16 %v446
  %v527 = vunpack.c.l.b16 %v447
  %v528 = vunpack.c.h.b16 %v446
  %v529 = vunpack.c.h.b16 %v447
  %v530 = vunpack.c.l.b16 %v448
  %v531 = vunpack.c.l.b16 %v449
  %v532 = vunpack.c.h.b16 %v448
  %v533 = vunpack.c.h.b16 %v449
  %v534 = vunpack.c.l.b16 %v450
  %v535 = vunpack.c.l.b16 %v451
  %v536 = vunpack.c.h.b16 %v450
  %v537 = vunpack.c.h.b16 %v451
  %v538 = vunpack.c.l.b16 %v452
  %v539 = vunpack.c.l.b16 %v453
  %v540 = vunpack.c.h.b16 %v452
  %v541 = vunpack.c.h.b16 %v453
  %v542 = vunpack.c.l.b16 %v454
  %v543 = vunpack.c.l.b16 %v455
  %v544 = vunpack.c.h.b16 %v454
  %v545 = vunpack.c.h.b16 %v455
  %v546 = vunpack.c.l.b16 %v456
  %v547 = vunpack.c.l.b16 %v457
  %v548 = vunpack.c.h.b16 %v456
  %v549 = vunpack.c.h.b16 %v457
  %v550 = vunpack.c.l.b16 %v458
  %v551 = vunpack.c.l.b16 %v459
  %v552 = vunpack.c.h.b16 %v458
  %v553 = vunpack.c.h.b16 %v459
  %v554 = vunpack.c.l.b16 %v460
  %v555 = vunpack.c.l.b16 %v461
  %v556 = vunpack.c.h.b16 %v460
  %v557 = vunpack.c.h.b16 %v461
  %v558 = vpack.c.b16 %v495, %v494
  %v559 = vpack.c.b16 %v497, %v496
  %v560 = vpack.c.b16 %v499, %v498
  %v561 = vpack.c.b16 %v501, %v500
  %v562 = vpack.c.b16 %v503, %v502
  %v563 = vpack.c.b16 %v505, %v504
  %v564 = vpack.c.b16 %v507, %v506
  %v565 = vpack.c.b16 %v509, %v508
  %v566 = vpack.c.b16 %v511, %v510
  %v567 = vpack.c.b16 %v513, %v512
  %v568 = vpack.c.b16 %v515, %v514
  %v569 = vpack.c.b16 %v517, %v516
  %v570 = vpack.c.b16 %v519, %v518
  %v571 = vpack.c.b16 %v521, %v520
  %v572 = vpack.c.b16 %v523, %v522
  %v573 = vpack.c.b16 %v525, %v524
  %v574 = vpack.c.b16 %v527, %v526
  %v575 = vpack.c.b16 %v529, %v528
  %v576 = vpack.c.b16 %v531, %v530
  %v577 = vpack.c.b16 %v533, %v532
  %v578 = vpack.c.b16 %v535, %v534
  %v579 = vpack.c.b16 %v537, %v536
  %v580 = vpack.c.b16 %v539, %v538
  %v581 = vpack.c.b16 %v541, %v540
  %v582 = vpack.c.b16 %v543, %v542
  %v583 = vpack.c.b16 %v545, %v544
  %v584 = vpack.c.b16 %v547, %v546
  %v585 = vpack.c.b16 %v549, %v548
  %v586 = vpack.c.b16 %v551, %v550
  %v587 = vpack.c.b16 %v553, %v552
  %v588 = vpack.c.b16 %v555, %v554
  %v589 = vpack.c.b16 %v557, %v556
  %vm622 = vcmask 1043456
  %vm623 = vcmask 523268
  %vm624 = vmor %vm623, %vm622
  %625 = vst.msk [vmem:[%s3] sm:$0xff] %vm624, %v558
  %626 = vst.msk [vmem:[%s3 + $0x8] sm:$0xff] %vm624, %v559
  %627 = vst.msk [vmem:[%s3 + $0x10] sm:$0xff] %vm624, %v560
  %628 = vst.msk [vmem:[%s3 + $0x18] sm:$0xff] %vm624, %v561
  %629 = vst.msk [vmem:[%s3 + $0x20] sm:$0xff] %vm624, %v562
  %630 = vst.msk [vmem:[%s3 + $0x28] sm:$0xff] %vm624, %v563
  %631 = vst.msk [vmem:[%s3 + $0x30] sm:$0xff] %vm624, %v564
  %632 = vst.msk [vmem:[%s3 + $0x38] sm:$0xff] %vm624, %v565
  %633 = vst.msk [vmem:[%s3 + $0x40] sm:$0xff] %vm624, %v566
  %634 = vst.msk [vmem:[%s3 + $0x48] sm:$0xff] %vm624, %v567
  %635 = vst.msk [vmem:[%s3 + $0x50] sm:$0xff] %vm624, %v568
  %636 = vst.msk [vmem:[%s3 + $0x58] sm:$0xff] %vm624, %v569
  %637 = vst.msk [vmem:[%s3 + $0x60] sm:$0xff] %vm624, %v570
  %638 = vst.msk [vmem:[%s3 + $0x68] sm:$0xff] %vm624, %v571
  %639 = vst.msk [vmem:[%s3 + $0x70] sm:$0xff] %vm624, %v572
  %640 = vst.msk [vmem:[%s3 + $0x78] sm:$0xff] %vm624, %v573
  %641 = vst.msk [vmem:[%s3 + $0x80] sm:$0xff] %vm624, %v574
  %642 = vst.msk [vmem:[%s3 + $0x88] sm:$0xff] %vm624, %v575
  %643 = vst.msk [vmem:[%s3 + $0x90] sm:$0xff] %vm624, %v576
  %644 = vst.msk [vmem:[%s3 + $0x98] sm:$0xff] %vm624, %v577
  %645 = vst.msk [vmem:[%s3 + $0xa0] sm:$0xff] %vm624, %v578
  %646 = vst.msk [vmem:[%s3 + $0xa8] sm:$0xff] %vm624, %v579
  %647 = vst.msk [vmem:[%s3 + $0xb0] sm:$0xff] %vm624, %v580
  %648 = vst.msk [vmem:[%s3 + $0xb8] sm:$0xff] %vm624, %v581
  %649 = vst.msk [vmem:[%s3 + $0xc0] sm:$0xff] %vm624, %v582
  %650 = vst.msk [vmem:[%s3 + $0xc8] sm:$0xff] %vm624, %v583
  %651 = vst.msk [vmem:[%s3 + $0xd0] sm:$0xff] %vm624, %v584
  %652 = vst.msk [vmem:[%s3 + $0xd8] sm:$0xff] %vm624, %v585
  %653 = vst.msk [vmem:[%s3 + $0xe0] sm:$0xff] %vm624, %v586
  %654 = vst.msk [vmem:[%s3 + $0xe8] sm:$0xff] %vm624, %v587
  %655 = vst.msk [vmem:[%s3 + $0xf0] sm:$0xff] %vm624, %v588
  %656 = vst.msk [vmem:[%s3 + $0xf8] sm:$0xff] %vm624, %v589
  %689 = vrot.lane.b32.xlu0 %v242, 64
  %v690 = vpop.permute.xlu0 %689
  %691 = vrot.lane.b32.xlu0 %v248, 64
  %v692 = vpop.permute.xlu0 %691
  %693 = vrot.lane.b32.xlu0 %v254, 64
  %v694 = vpop.permute.xlu0 %693
  %695 = vrot.lane.b32.xlu0 %v260, 64
  %v696 = vpop.permute.xlu0 %695
  %697 = vrot.lane.b32.xlu0 %v266, 64
  %v698 = vpop.permute.xlu0 %697
  %699 = vrot.lane.b32.xlu0 %v272, 64
  %v700 = vpop.permute.xlu0 %699
  %701 = vrot.lane.b32.xlu0 %v278, 64
  %v702 = vpop.permute.xlu0 %701
  %703 = vrot.lane.b32.xlu0 %v284, 64
  %v704 = vpop.permute.xlu0 %703
  %705 = vrot.lane.b32.xlu0 %v290, 64
  %v706 = vpop.permute.xlu0 %705
  %707 = vrot.lane.b32.xlu0 %v296, 64
  %v708 = vpop.permute.xlu0 %707
  %709 = vrot.lane.b32.xlu0 %v302, 64
  %v710 = vpop.permute.xlu0 %709
  %711 = vrot.lane.b32.xlu0 %v308, 64
  %v712 = vpop.permute.xlu0 %711
  %713 = vrot.lane.b32.xlu0 %v314, 64
  %v714 = vpop.permute.xlu0 %713
  %715 = vrot.lane.b32.xlu0 %v320, 64
  %v716 = vpop.permute.xlu0 %715
  %717 = vrot.lane.b32.xlu0 %v326, 64
  %v718 = vpop.permute.xlu0 %717
  %719 = vrot.lane.b32.xlu0 %v332, 64
  %v720 = vpop.permute.xlu0 %719
  %721 = vrot.lane.b32.xlu0 %v338, 64
  %v722 = vpop.permute.xlu0 %721
  %723 = vrot.lane.b32.xlu0 %v344, 64
  %v724 = vpop.permute.xlu0 %723
  %725 = vrot.lane.b32.xlu0 %v350, 64
  %v726 = vpop.permute.xlu0 %725
  %727 = vrot.lane.b32.xlu0 %v356, 64
  %v728 = vpop.permute.xlu0 %727
  %729 = vrot.lane.b32.xlu0 %v362, 64
  %v730 = vpop.permute.xlu0 %729
  %731 = vrot.lane.b32.xlu0 %v368, 64
  %v732 = vpop.permute.xlu0 %731
  %733 = vrot.lane.b32.xlu0 %v374, 64
  %v734 = vpop.permute.xlu0 %733
  %735 = vrot.lane.b32.xlu0 %v380, 64
  %v736 = vpop.permute.xlu0 %735
  %737 = vrot.lane.b32.xlu0 %v386, 64
  %v738 = vpop.permute.xlu0 %737
  %739 = vrot.lane.b32.xlu0 %v392, 64
  %v740 = vpop.permute.xlu0 %739
  %741 = vrot.lane.b32.xlu0 %v398, 64
  %v742 = vpop.permute.xlu0 %741
  %743 = vrot.lane.b32.xlu0 %v404, 64
  %v744 = vpop.permute.xlu0 %743
  %745 = vrot.lane.b32.xlu0 %v410, 64
  %v746 = vpop.permute.xlu0 %745
  %747 = vrot.lane.b32.xlu0 %v416, 64
  %v748 = vpop.permute.xlu0 %747
  %749 = vrot.lane.b32.xlu0 %v422, 64
  %v750 = vpop.permute.xlu0 %749
  %751 = vrot.lane.b32.xlu0 %v428, 64
  %v752 = vpop.permute.xlu0 %751
  %785 = vst.msk [vmem:[%s4] sm:$0xff] %vm76, %v690
  %786 = vst.msk [vmem:[%s4 + $0x8] sm:$0xff] %vm76, %v692
  %787 = vst.msk [vmem:[%s4 + $0x10] sm:$0xff] %vm76, %v694
  %788 = vst.msk [vmem:[%s4 + $0x18] sm:$0xff] %vm76, %v696
  %789 = vst.msk [vmem:[%s4 + $0x20] sm:$0xff] %vm76, %v698
  %790 = vst.msk [vmem:[%s4 + $0x28] sm:$0xff] %vm76, %v700
  %791 = vst.msk [vmem:[%s4 + $0x30] sm:$0xff] %vm76, %v702
  %792 = vst.msk [vmem:[%s4 + $0x38] sm:$0xff] %vm76, %v704
  %793 = vst.msk [vmem:[%s4 + $0x40] sm:$0xff] %vm76, %v706
  %794 = vst.msk [vmem:[%s4 + $0x48] sm:$0xff] %vm76, %v708
  %795 = vst.msk [vmem:[%s4 + $0x50] sm:$0xff] %vm76, %v710
  %796 = vst.msk [vmem:[%s4 + $0x58] sm:$0xff] %vm76, %v712
  %797 = vst.msk [vmem:[%s4 + $0x60] sm:$0xff] %vm76, %v714
  %798 = vst.msk [vmem:[%s4 + $0x68] sm:$0xff] %vm76, %v716
  %799 = vst.msk [vmem:[%s4 + $0x70] sm:$0xff] %vm76, %v718
  %800 = vst.msk [vmem:[%s4 + $0x78] sm:$0xff] %vm76, %v720
  %801 = vst.msk [vmem:[%s4 + $0x80] sm:$0xff] %vm76, %v722
  %802 = vst.msk [vmem:[%s4 + $0x88] sm:$0xff] %vm76, %v724
  %803 = vst.msk [vmem:[%s4 + $0x90] sm:$0xff] %vm76, %v726
  %804 = vst.msk [vmem:[%s4 + $0x98] sm:$0xff] %vm76, %v728
  %805 = vst.msk [vmem:[%s4 + $0xa0] sm:$0xff] %vm76, %v730
  %806 = vst.msk [vmem:[%s4 + $0xa8] sm:$0xff] %vm76, %v732
  %807 = vst.msk [vmem:[%s4 + $0xb0] sm:$0xff] %vm76, %v734
  %808 = vst.msk [vmem:[%s4 + $0xb8] sm:$0xff] %vm76, %v736
  %809 = vst.msk [vmem:[%s4 + $0xc0] sm:$0xff] %vm76, %v738
  %810 = vst.msk [vmem:[%s4 + $0xc8] sm:$0xff] %vm76, %v740
  %811 = vst.msk [vmem:[%s4 + $0xd0] sm:$0xff] %vm76, %v742
  %812 = vst.msk [vmem:[%s4 + $0xd8] sm:$0xff] %vm76, %v744
  %813 = vst.msk [vmem:[%s4 + $0xe0] sm:$0xff] %vm76, %v746
  %814 = vst.msk [vmem:[%s4 + $0xe8] sm:$0xff] %vm76, %v748
  %815 = vst.msk [vmem:[%s4 + $0xf0] sm:$0xff] %vm76, %v750
  %816 = vst.msk [vmem:[%s4 + $0xf8] sm:$0xff] %vm76, %v752
  // Predicated region
  $region14: #{tpu_custom_call.1} parent=0 // pred_check
    _
  $region15: #{tpu_custom_call.1} parent=0 // pred_check_branch
    %818 = sbr.rel (0) target = $region17
  $region16: #{tpu_custom_call.1} parent=0 // pred_region
    _
  $region17: #{tpu_custom_call.1} parent=0 // pred_fallthru
    _
  // Predicated region
  $region18: #{tpu_custom_call.1} parent=0 // pred_check
    _
  $region19: #{tpu_custom_call.1} parent=0 // pred_check_branch
    %820 = sbr.rel (0) target = $region21
  $region20: #{tpu_custom_call.1} parent=0 // pred_region
    _
  $region21: #{tpu_custom_call.1} parent=0 // pred_fallthru
    _
  // Predicated region
  $region22: #{tpu_custom_call.1} parent=0 // pred_check
    _
  $region23: #{tpu_custom_call.1} parent=0 // pred_check_branch
    %822 = sbr.rel (0) target = $region25
  $region24: #{tpu_custom_call.1} parent=0 // pred_region
    _
  $region25: #{tpu_custom_call.1} parent=0 // pred_fallthru
    _
  // Predicated region
  $region26: #{tpu_custom_call.1} parent=0 // pred_check
    _
  $region27: #{tpu_custom_call.1} parent=0 // pred_check_branch
    %824 = sbr.rel (0) target = $region29
  $region28: #{tpu_custom_call.1} parent=0 // pred_region
    _
  $region29: #{tpu_custom_call.1} parent=0 // pred_fallthru
    _

</llo_original>
